<compile_context>
chip_gen: v6e
topology: v6e:2x2x1
jax: 0.10.0
libtpu: 0.0.40
codegen_flags: <defaults>
</compile_context>

<pallas_src>
import functools

import jax
import jax.numpy as jnp
import numpy as np
from jax.experimental import pallas as pl
from jax.experimental.pallas import tpu as pltpu

_OUT_SUB, _OUT_LANE = 8, 128  # one (8,128)-aligned f32 output block per grid step


def _nce_mae_tile_kernel(pred_ref, labels_ref, out_ref, *, beta, n_total, tile_n):
    # Math in f32 in-kernel (required on v5e; lets callers stream bf16 logits
    # from HBM for half the bandwidth on v6e/v7x).
    logits = pred_ref[...].astype(jnp.float32)          # (tile_n, C)
    tn, c = logits.shape

    # Labels arrive lane-dense as (1, tile_n); relayout to a column so they can
    # broadcast against the class-lane iota. XLU has plenty of slack here.
    labels_col = labels_ref[...].reshape(tn, 1)          # (tile_n, 1) int32

    # Gather logits[row, label[row]] via iota compare + select + row-sum
    # (no materialized one-hot tensor).
    class_ids = jax.lax.broadcasted_iota(jnp.int32, (tn, c), 1)
    logit_y = jnp.sum(jnp.where(class_ids == labels_col, logits, 0.0),
                      axis=1, keepdims=True)              # (tile_n, 1)

    # Numerically stable logsumexp over the class axis.
    m = jnp.max(logits, axis=1, keepdims=True)
    e = jnp.exp(logits - m)
    lse = m + jnp.log(jnp.sum(e, axis=1, keepdims=True))  # (tile_n, 1)

    ce = lse - logit_y                                     # cross entropy per row
    p_y = jnp.exp(logit_y - lse)                           # softmax prob of the label
    mae = 2.0 * (1.0 - p_y)                                # sum_c |softmax - onehot|
    per_row = ce + jnp.float32(beta) * mae                 # (tile_n, 1)

    # Mask rows past the end of the batch (ragged last tile may hold garbage
    # that turned into NaN/Inf above; where() keeps it out of the reduction).
    row0 = pl.program_id(0) * tile_n
    rid = row0 + jax.lax.broadcasted_iota(jnp.int32, (tn, 1), 0)
    tile_sum = jnp.sum(jnp.where(rid < n_total, per_row, 0.0))   # scalar

    # Lane-dense, fully (8,128)-aligned store (every element holds the tile
    # sum); the wrapper picks element [0,0] of each block.
    out_ref[...] = jnp.broadcast_to(tile_sum, (_OUT_SUB, _OUT_LANE))


def _choose_tile_n(n, c, itemsize, per_buffer_bytes=8 << 20, max_rows=8192):
    """Rows per block, sized by bytes of the (lane-padded) logits tile."""
    c_pad = ((c + 127) // 128) * 128                # lane padding of a logits row
    row_bytes = max(c_pad * itemsize, 1)
    rows = min(per_buffer_bytes // row_bytes, max_rows)  # row cap only bounds the
    rows = (rows // 128) * 128                           # in-kernel label relayout
    rows = max(rows, 128)        # labels stream as (1, tile_n): lane dim must be
    if rows >= n:                # a multiple of 128 (or the full batch)
        if n >= 256:
            # Keep >=2 grid steps so v7x can shard the parallel axis across
            # its two TensorCores.
            half = ((n + 255) // 256) * 128         # ~ceil(n/2) rounded up to 128
            if half < n:
                return half
        return n
    return rows


def nce_and_mae(pred, labels, num_classes, alpha=1.0, beta=1.0, gamma=1,
                tile_n=None):
    """pred: (N, C) float logits (f32 or bf16), labels: (N,) int. Scalar f32 loss."""
    del alpha, gamma  # stored by the PyTorch module but unused in its forward
    n, c = pred.shape
    assert c == num_classes
    # Lane-dense labels: (1, N) costs ~32 B/label of HBM vs ~512 B/label for a
    # lane-padded (N, 1) column.
    labels_row = labels.astype(jnp.int32).reshape(1, n)

    if tile_n is None:
        tile_n = _choose_tile_n(n, c, pred.dtype.itemsize)
    tile_n = int(tile_n)
    assert tile_n == n or tile_n % 128 == 0, "tile_n must be == N or a multiple of 128"
    num_tiles = pl.cdiv(n, tile_n)

    # Scoped-VMEM limit from actual tile bytes (double-buffered logits + labels
    # + output) with headroom; capped at v7x's 64 MiB physical VMEM.
    c_pad = ((c + 127) // 128) * 128
    t_pad = ((tile_n + 127) // 128) * 128
    vmem_bytes = (2 * tile_n * c_pad * pred.dtype.itemsize    # logits, double-buffered
                  + 2 * 8 * t_pad * 4                         # labels, double-buffered
                  + 2 * _OUT_SUB * _OUT_LANE * 4              # output blocks
                  + (4 << 20))                                # headroom / internal scratch
    vmem_bytes = int(min(max(vmem_bytes, 32 << 20), 64 << 20))

    partial = pl.pallas_call(
        functools.partial(_nce_mae_tile_kernel, beta=float(beta),
                          n_total=int(n), tile_n=tile_n),
        out_shape=jax.ShapeDtypeStruct((num_tiles * _OUT_SUB, _OUT_LANE),
                                       jnp.float32),
        grid=(num_tiles,),
        in_specs=[
            pl.BlockSpec((tile_n, c), lambda i: (i, 0)),   # logits tile
            pl.BlockSpec((1, tile_n), lambda i: (0, i)),   # lane-dense labels tile
        ],
        out_specs=pl.BlockSpec((_OUT_SUB, _OUT_LANE), lambda i: (i, 0)),
        compiler_params=pltpu.CompilerParams(
            dimension_semantics=("parallel",),             # shards tiles on v7x's 2 TCs
            vmem_limit_bytes=vmem_bytes),
    )(pred, labels_row)

    # One valid scalar per tile (block element [0,0]); tiny final reduce.
    tile_sums = partial.reshape(num_tiles, _OUT_SUB, _OUT_LANE)[:, 0, 0]
    # mean(CE) + beta*mean(MAE) == mean(CE + beta*MAE)
    return jnp.sum(tile_sums) / jnp.float32(n)


def _reference(pred, labels, num_classes, beta=1.0):
    # pure-JAX reference mirroring the PyTorch module
    logits = pred.astype(jnp.float32)
    logp = jax.nn.log_softmax(logits, axis=1)
    p = jax.nn.softmax(logits, axis=1)
    onehot = jax.nn.one_hot(labels, num_classes, dtype=jnp.float32)
    ce = jnp.mean(-jnp.sum(onehot * logp, axis=1))
    mae = jnp.mean(jnp.sum(jnp.abs(p - onehot), axis=1))
    return ce + beta * mae


if __name__ == "__main__":
    key = jax.random.PRNGKey(0)
    k1, k2, k3, k4 = jax.random.split(key, 4)

    # Primary small example: batch=8, 32 classes, f32 logits (single block).
    N, C = 8, 32
    pred = jax.random.normal(k1, (N, C), dtype=jnp.float32)
    labels = jax.random.randint(k2, (N,), 0, C, dtype=jnp.int32)
    loss = jax.block_until_ready(
        nce_and_mae(pred, labels, C, alpha=1.0, beta=1.0, gamma=1))
    ref = _reference(pred, labels, C, beta=1.0)
    np.testing.assert_allclose(np.asarray(loss), np.asarray(ref),
                               rtol=1e-5, atol=1e-5)

    # Multi-tile path: 300 rows -> auto tile of 256 (grid=2, ragged last tile
    # masked in-kernel), bf16 logits, lane-blocked labels.
    N2, C2 = 300, 48
    pred2 = jax.random.normal(k3, (N2, C2), dtype=jnp.float32).astype(jnp.bfloat16)
    labels2 = jax.random.randint(k4, (N2,), 0, C2, dtype=jnp.int32)
    loss2 = jax.block_until_ready(nce_and_mae(pred2, labels2, C2, beta=0.5))
    ref2 = _reference(pred2, labels2, C2, beta=0.5)
    np.testing.assert_allclose(np.asarray(loss2), np.asarray(ref2),
                               rtol=1e-4, atol=1e-4)

    print("KERNEL_OK")
</pallas_src>

<mosaic_0001>
module attributes {stable_mosaic.version = 11 : i64} {
  func.func @_nce_mae_tile_kernel(%arg0: i32, %arg1: memref<8x32xf32, #tpu.memory_space<vmem>>, %arg2: memref<1x8xi32, #tpu.memory_space<vmem>>, %arg3: memref<8x128xf32, #tpu.memory_space<vmem>>) attributes {dimension_semantics = [#tpu.dimension_semantics<parallel>], iteration_bounds = array<i64: 1>, scalar_prefetch = 0 : i64, scratch_operands = 0 : i64, tpu.core_type = #tpu.core_type<tc>, window_params = [{transform_indices = @transform_0, window_bounds = array<i64: 8, 32>}, {transform_indices = @transform_1, window_bounds = array<i64: 1, 8>}, {transform_indices = @transform_2, window_bounds = array<i64: 8, 128>}]} {
    %c0 = arith.constant 0 : index
    %c0_0 = arith.constant 0 : index
    %0 = vector.load %arg1[%c0, %c0_0] : memref<8x32xf32, #tpu.memory_space<vmem>>, vector<8x32xf32>
    %c0_1 = arith.constant 0 : index
    %c0_2 = arith.constant 0 : index
    %1 = vector.load %arg2[%c0_1, %c0_2] : memref<1x8xi32, #tpu.memory_space<vmem>>, vector<1x8xi32>
    %2 = vector.shape_cast %1 : vector<1x8xi32> to vector<8x1xi32>
    %3 = tpu.iota {dimensions = array<i32: 1>} : vector<8x32xi32>
    %4 = vector.broadcast %2 : vector<8x1xi32> to vector<8x32xi32>
    %5 = arith.cmpi eq, %3, %4 : vector<8x32xi32>
    %cst = arith.constant 0.000000e+00 : f32
    %6 = vector.broadcast %cst : f32 to vector<8x32xf32>
    %7 = arith.select %5, %0, %6 : vector<8x32xi1>, vector<8x32xf32>
    %cst_3 = arith.constant dense<0.000000e+00> : vector<8xf32>
    %8 = vector.multi_reduction <add>, %7, %cst_3 [1] : vector<8x32xf32> to vector<8xf32>
    %9 = vector.shape_cast %8 : vector<8xf32> to vector<8x1xf32>
    %cst_4 = arith.constant dense<0xFF800000> : vector<8xf32>
    %10 = vector.multi_reduction <maximumf>, %0, %cst_4 [1] : vector<8x32xf32> to vector<8xf32>
    %11 = vector.shape_cast %10 : vector<8xf32> to vector<8x1xf32>
    %12 = vector.broadcast %11 : vector<8x1xf32> to vector<8x32xf32>
    %13 = arith.subf %0, %12 : vector<8x32xf32>
    %14 = math.exp %13 : vector<8x32xf32>
    %cst_5 = arith.constant dense<0.000000e+00> : vector<8xf32>
    %15 = vector.multi_reduction <add>, %14, %cst_5 [1] : vector<8x32xf32> to vector<8xf32>
    %16 = vector.shape_cast %15 : vector<8xf32> to vector<8x1xf32>
    %17 = math.log %16 : vector<8x1xf32>
    %18 = arith.addf %11, %17 : vector<8x1xf32>
    %19 = arith.subf %18, %9 : vector<8x1xf32>
    %20 = arith.subf %9, %18 : vector<8x1xf32>
    %21 = math.exp %20 : vector<8x1xf32>
    %cst_6 = arith.constant 1.000000e+00 : f32
    %22 = vector.broadcast %cst_6 : f32 to vector<8x1xf32>
    %23 = arith.subf %22, %21 : vector<8x1xf32>
    %cst_7 = arith.constant 2.000000e+00 : f32
    %24 = vector.broadcast %cst_7 : f32 to vector<8x1xf32>
    %25 = arith.mulf %24, %23 : vector<8x1xf32>
    %cst_8 = arith.constant 1.000000e+00 : f32
    %26 = vector.broadcast %cst_8 : f32 to vector<8x1xf32>
    %27 = arith.mulf %26, %25 : vector<8x1xf32>
    %28 = arith.addf %19, %27 : vector<8x1xf32>
    %c8_i32 = arith.constant 8 : i32
    %29 = arith.muli %arg0, %c8_i32 : i32
    %30 = tpu.iota {dimensions = array<i32: 0>} : vector<8x1xi32>
    %31 = vector.broadcast %29 : i32 to vector<8x1xi32>
    %32 = arith.addi %31, %30 : vector<8x1xi32>
    %c8_i32_9 = arith.constant 8 : i32
    %33 = vector.broadcast %c8_i32_9 : i32 to vector<8x1xi32>
    %34 = arith.cmpi slt, %32, %33 : vector<8x1xi32>
    %cst_10 = arith.constant 0.000000e+00 : f32
    %35 = vector.broadcast %cst_10 : f32 to vector<8x1xf32>
    %36 = arith.select %34, %28, %35 : vector<8x1xi1>, vector<8x1xf32>
    %37 = vector.shape_cast %36 : vector<8x1xf32> to vector<1x8x1xf32>
    %cst_11 = arith.constant dense<0.000000e+00> : vector<1xf32>
    %38 = vector.multi_reduction <add>, %37, %cst_11 [1, 2] : vector<1x8x1xf32> to vector<1xf32>
    %39 = vector.shape_cast %38 : vector<1xf32> to vector<1x1x1xf32>
    %40 = vector.extract %39[0, 0, 0] : f32 from vector<1x1x1xf32>
    %41 = vector.broadcast %40 : f32 to vector<8x128xf32>
    %c0_12 = arith.constant 0 : index
    %c0_13 = arith.constant 0 : index
    %42 = vector.load %arg3[%c0_12, %c0_13] : memref<8x128xf32, #tpu.memory_space<vmem>>, vector<8x128xf32>
    tpu.vector_store %arg3[%c0_12, %c0_13], %41 {strides = array<i32>} : memref<8x128xf32, #tpu.memory_space<vmem>>, vector<8x128xf32>,
    return
  }
  func.func @transform_0(%arg0: i32) -> (i32, i32) {
    %c0_i32 = arith.constant 0 : i32
    %c0_i32_0 = arith.constant 0 : i32
    return %arg0, %c0_i32 : i32, i32
  }
  func.func @transform_1(%arg0: i32) -> (i32, i32) {
    %c0_i32 = arith.constant 0 : i32
    %c0_i32_0 = arith.constant 0 : i32
    return %c0_i32, %arg0 : i32, i32
  }
  func.func @transform_2(%arg0: i32) -> (i32, i32) {
    %c0_i32 = arith.constant 0 : i32
    %c0_i32_0 = arith.constant 0 : i32
    return %arg0, %c0_i32 : i32, i32
  }
}

</mosaic_0001>

<llo_original>
// kernel: tpu_custom_call.1
$region0: #{tpu_custom_call.1}
  #allocation0 [shape = 'u32[]', space=smem, size = 0x4, offset = 0x4, fixed_abs, tag = 'smem constant byte address 0x4 - core index']
  #allocation1 [shape = 'u32[144,128]{1,0:T(1,128)}', space=vmem, size = 0x12000, scoped, tag = 'internal scratch']
  %s0 = inlined_call_operand.hbm [shape: f32[8,32], index: 0, kind: input, shape index: {}]
  %s1 = inlined_call_operand.vmem [shape: s32[1,8], index: 1, kind: input, shape index: {}]
  %s2 = inlined_call_operand.hbm [shape: f32[8,128], index: 2, kind: output, shape index: {}]
  %s3 = sld [smem:[#allocation0]]
  $region22: #{tpu_custom_call.1} parent=0
    _
  %s5 = ssub.s32 1, %s3
  %s6 = scalar_select 0, %s5, %s3
  $region1: #{tpu_custom_call.1} parent=0
    #allocation2 [shape = 'u8[4096]{0}', space=vmem, size = 0x1000, scoped, tag = 'input window, operand 0, single buffered']
    #allocation3 [shape = 's32[1]{0}', space=sflag, size = 0x4, scoped, tag = 'scoped memory for tpu_custom_call.1']
    #allocation4 [shape = 's32[1]{0}', space=sflag, size = 0x4, scoped, tag = 'scoped memory for tpu_custom_call.1']
    #allocation5 [shape = 'u8[4096]{0}', space=vmem, size = 0x1000, scoped, tag = 'output window, operand 0, single buffered']
    %7 = vsyncpa [#allocation3], 0
    %8 = vsyncpa [#allocation4], 0
    // Predicated region
    $region2: #{tpu_custom_call.1} parent=1 // pred_check
      _
    $region3: #{tpu_custom_call.1} parent=1 // pred_check_branch
      %10 = sbr.rel (0) target = $region5
    $region4: #{tpu_custom_call.1} parent=1 // pred_region
      %s12 = ssub.s32 128, 128
      %13 = vsyncadd [#allocation3], %s12
      %s15 = sshll.u32 [#allocation2], 4
      %s16 = int_to_ptr.vmem [resolvable:$true] %s15
      %18 = dma.hbm_to_vmem [thread:$0]  %s0, 128, %s16, [#allocation3]
    $region5: #{tpu_custom_call.1} parent=1 // pred_fallthru
      _
    // Predicated region
    $region6: #{tpu_custom_call.1} parent=1 // pred_check
      _
    $region7: #{tpu_custom_call.1} parent=1 // pred_check_branch
      %20 = sbr.rel (0) target = $region9
    $region8: #{tpu_custom_call.1} parent=1 // pred_region
      _
    $region9: #{tpu_custom_call.1} parent=1 // pred_fallthru
      _
    // Predicated region
    $region10: #{tpu_custom_call.1} parent=1 // pred_check
      _
    $region11: #{tpu_custom_call.1} parent=1 // pred_check_branch
      %22 = sbr.rel (0) target = $region13
    $region12: #{tpu_custom_call.1} parent=1 // pred_region
      %23 = dma.done [#allocation3], 128
    $region13: #{tpu_custom_call.1} parent=1 // pred_fallthru
      _
    %v24 = vld [vmem:[#allocation2] sm:$0xff]
    %v25 = vld [vmem:[%s1] sm:$0x1]
    %v26 = vlaneseq
    %v27 = vshrl.u32 %v26, 7
    %v28 = vsub.s32 0, %v27
    %v29 = vrot.slane %v25, %v28
    %31 = vbcast.lane.b32.xlu0 %v29, 256
    %v32 = vpop.permute.xlu0 %31
    %v33 = vlaneseq
    %v34 = vand.u32 %v33, 127
    %vm35 = vcmp.eq.s32.totalorder %v34, %v32
    %v36 = vsel %vm35, %v24, 0.0
    %vm37 = vcmask 261120
    %v38 = vsel %vm37, %v36, 0.0
    %39 = vadd.xlane.f32.xlu0 %v38
    %v40 = vpop.xlane.xlu0 %39
    %v41 = vsel %vm37, %v24, -inf
    %42 = vmax.xlane.f32.xlu0 %v41
    %v43 = vpop.xlane.xlu0 %42
    %v44 = vsub.f32 %v24, %v43
    %v45 = vmul.f32 %v44, 1.442695
    %v46 = vpow.pop %v45
    %v47 = vsel %vm37, %v46, 0.0
    %48 = vadd.xlane.f32.xlu0 %v47
    %v49 = vpop.xlane.xlu0 %48
    %v50 = vlog2.pop %v49
    %v51 = vmul.f32 %v50, 0.6931472
    %v52 = vadd.f32 %v43, %v51
    %v53 = vsub.f32 %v52, %v40
    %v54 = vsub.f32 %v40, %v52
    %v55 = vmul.f32 %v54, 1.442695
    %v56 = vpow.pop %v55
    %v57 = vsub.f32 1.0, %v56
    %v58 = vmul.f32 %v57, 2.0
    %v59 = vadd.f32 %v53, %v58
    %s60 = smul.u32 0, 8
    %v61 = vlaneseq
    %v62 = vshrl.u32 %v61, 7
    %v63 = vstv %s60
    %v64 = vadd.s32 %v63, %v62
    %vm65 = vcmp.lt.s32.totalorder %v64, 8
    %v66 = vsel %vm65, %v59, 0.0
    %vm67 = vcmask 7168
    %v68 = vsel %vm67, %v66, 0.0
    %69 = vadd.xlane.f32.xlu0 %v68
    %v70 = vpop.xlane.xlu0 %69
    %v71 = vrot.slane %v70, 4
    %v72 = vadd.f32 %v70, %v71
    %v73 = vrot.slane %v72, 2
    %v74 = vadd.f32 %v72, %v73
    %v75 = vrot.slane %v74, 1
    %v76 = vadd.f32 %v74, %v75
    %s77 = vtos %v76
    %v78 = vstv %s77
    %79 = vst [vmem:[#allocation5] sm:$0xff] %v78
    // Predicated region
    $region14: #{tpu_custom_call.1} parent=1 // pred_check
      _
    $region15: #{tpu_custom_call.1} parent=1 // pred_check_branch
      %81 = sbr.rel (0) target = $region17
    $region16: #{tpu_custom_call.1} parent=1 // pred_region
      %s83 = ssub.s32 128, 128
      %84 = vsyncadd [#allocation4], %s83
      %s86 = sshll.u32 [#allocation5], 4
      %s87 = int_to_ptr.vmem [resolvable:$true] %s86
      %89 = dma.vmem_to_hbm [thread:$0]  %s87, 128, %s2, [#allocation4]
    $region17: #{tpu_custom_call.1} parent=1 // pred_fallthru
      _
    // Predicated region
    $region18: #{tpu_custom_call.1} parent=1 // pred_check
      _
    $region19: #{tpu_custom_call.1} parent=1 // pred_check_branch
      %91 = sbr.rel (0) target = $region21
    $region20: #{tpu_custom_call.1} parent=1 // pred_region
      %92 = dma.done [#allocation4], 128
    $region21: #{tpu_custom_call.1} parent=1 // pred_fallthru
      _
    %93 = vsyncpa [#allocation3], 1
    %94 = vsyncpa [#allocation4], 1

</llo_original>
